<compile_context>
chip_gen: v5e
topology: v5e:2x2
jax: 0.10.0
libtpu: 0.0.40
codegen_flags: <defaults>
</compile_context>

<pallas_src>
import jax
import jax.numpy as jnp
from jax.experimental import pallas as pl
from jax.experimental.pallas import tpu as pltpu

_EPS = 1e-5
_LEAKY_SLOPE = 0.01


def _round_up(x, m):
    return ((x + m - 1) // m) * m


def conv_decoder_kernel(x_ref, w1_ref, b1_ref, w2_ref, b2_ref, o_ref):
    """One batch tile of the fused MLP head.

    x_ref : (TB, C_in)        bf16 activations (pipelined per grid step)
    w1_ref: (C_in, C_inner)   bf16, resident across grid steps
    b1_ref: (1, C_inner)      f32 bias
    w2_ref: (C_inner, E_pad)  bf16, LayerNorm gamma folded in, zero-padded to lane-dense E
    b2_ref: (1, E_pad)        f32, beta @ W2 folded bias, zero-padded
    o_ref : (TB, E_pad)       f32 output tile
    """
    # Linear 1 (MXU, bf16 operands, f32 accumulation) + bias.
    h = jnp.dot(x_ref[...], w1_ref[...], preferred_element_type=jnp.float32)
    h = h + b1_ref[...]

    # LeakyReLU (negative_slope = 0.01): mul + max, no compare/select.
    h = jnp.maximum(h, _LEAKY_SLOPE * h)

    # LayerNorm over the feature dim (biased variance, eps=1e-5), f32 math.
    # The affine (gamma, beta) is folded into W2'/b2' at wrapper time.
    mean = jnp.mean(h, axis=-1, keepdims=True)
    c = h - mean
    var = jnp.mean(c * c, axis=-1, keepdims=True)
    hn = c * jax.lax.rsqrt(var + _EPS)

    # Linear 2 (gamma-folded, lane-dense-padded weights; folded-beta bias).
    y = jnp.dot(hn.astype(w2_ref.dtype), w2_ref[...],
                preferred_element_type=jnp.float32)
    o_ref[...] = (y + b2_ref[...]).astype(o_ref.dtype)


def _prepare_params(params):
    """Fold LayerNorm affine into W2, pad emb to a lane-dense multiple of 128,
    and cast the matmul operands to bf16."""
    w1, b1 = params["w1"], params["b1"]
    gamma, beta, w2 = params["gamma"], params["beta"], params["w2"]

    c_inner, emb = w2.shape
    emb_pad = _round_up(emb, 128)

    # (hn * gamma + beta) @ W2  ==  hn @ (gamma[:, None] * W2) + beta @ W2
    w2_folded = gamma[:, None] * w2
    b2_folded = (beta @ w2).reshape(1, emb)

    pad = emb_pad - emb
    if pad:
        w2_folded = jnp.pad(w2_folded, ((0, 0), (0, pad)))
        b2_folded = jnp.pad(b2_folded, ((0, 0), (0, pad)))

    return {
        "w1": w1.astype(jnp.bfloat16),
        "b1": b1.reshape(1, c_inner).astype(jnp.float32),
        "w2": w2_folded.astype(jnp.bfloat16),
        "b2": b2_folded.astype(jnp.float32),
        "emb": emb,
        "emb_pad": emb_pad,
    }


def conv_decoder_forward(x_nchw, params, *, block_b=None):
    """x_nchw: (B, C, H, W) like PyTorch. params: raw f32 dict from init_params."""
    B = x_nchw.shape[0]
    x_flat = x_nchw.reshape(B, -1)            # matches torch.reshape ordering
    c_in = x_flat.shape[1]

    prep = _prepare_params(params)
    c_inner = prep["w1"].shape[1]
    emb, emb_pad = prep["emb"], prep["emb_pad"]

    # Batch tile: multiple of 8 sublanes. Large tiles (up to 512) amortize the
    # ~0.35 us per-grid-step overhead on v5e/v6e; the VMEM budget below keeps
    # the choice safe for v7x's 64 MiB physical VMEM as well.
    if block_b is None:
        block_b = min(512, _round_up(B, 8))
    block_b = _round_up(block_b, 8)
    b_pad = _round_up(B, block_b)
    if b_pad != B:
        x_flat = jnp.pad(x_flat, ((0, b_pad - B), (0, 0)))
    x_flat = x_flat.astype(jnp.bfloat16)

    grid = (b_pad // block_b,)

    # VMEM budget from actual buffers: resident weights + double-buffered x/out
    # tiles, with headroom, capped well below v7x's 64 MiB physical VMEM.
    resident = c_in * c_inner * 2 + c_inner * emb_pad * 2 + (c_inner + emb_pad) * 4
    per_step = 2 * (block_b * c_in * 2 + block_b * emb_pad * 4)
    vmem_limit = int(min(max(2 * (resident + per_step) + (4 << 20), 16 << 20), 48 << 20))

    out = pl.pallas_call(
        conv_decoder_kernel,
        out_shape=jax.ShapeDtypeStruct((b_pad, emb_pad), jnp.float32),
        grid=grid,
        in_specs=[
            pl.BlockSpec((block_b, c_in), lambda i: (i, 0)),      # x tile, pipelined
            pl.BlockSpec((c_in, c_inner), lambda i: (0, 0)),      # W1 resident
            pl.BlockSpec((1, c_inner), lambda i: (0, 0)),         # b1 resident
            pl.BlockSpec((c_inner, emb_pad), lambda i: (0, 0)),   # W2' resident
            pl.BlockSpec((1, emb_pad), lambda i: (0, 0)),         # b2' resident
        ],
        out_specs=pl.BlockSpec((block_b, emb_pad), lambda i: (i, 0)),
        compiler_params=pltpu.CompilerParams(
            dimension_semantics=("parallel",),   # shard batch tiles across v7x's 2 TCs
            vmem_limit_bytes=vmem_limit,
        ),
    )(x_flat, prep["w1"], prep["b1"], prep["w2"], prep["b2"])

    return out[:B, :emb]


def init_params(key, in_channels, inner_channels, emb_dim):
    """Deterministic init mimicking torch.nn.Linear defaults (U(-1/sqrt(fan_in), ...))."""
    k1, k2, k3 = jax.random.split(key, 3)
    bound1 = 1.0 / jnp.sqrt(in_channels)
    bound2 = 1.0 / jnp.sqrt(inner_channels)
    # Stored pre-transposed: (fan_in, fan_out)
    w1 = jax.random.uniform(k1, (in_channels, inner_channels), jnp.float32, -bound1, bound1)
    b1 = jax.random.uniform(k2, (inner_channels,), jnp.float32, -bound1, bound1)
    w2 = jax.random.uniform(k3, (inner_channels, emb_dim), jnp.float32, -bound2, bound2) * 0.1
    gamma = jnp.ones((inner_channels,), jnp.float32)   # LayerNorm weight
    beta = jnp.zeros((inner_channels,), jnp.float32)   # LayerNorm bias
    return {"w1": w1, "b1": b1, "gamma": gamma, "beta": beta, "w2": w2}


def reference_forward(x_nchw, params):
    """Pure-f32 reference (matches the PyTorch module)."""
    x = x_nchw.reshape(x_nchw.shape[0], -1).astype(jnp.float32)
    h = x @ params["w1"] + params["b1"]
    h = jnp.where(h > 0, h, 0.01 * h)
    mean = jnp.mean(h, axis=-1, keepdims=True)
    var = jnp.mean((h - mean) ** 2, axis=-1, keepdims=True)
    hn = (h - mean) / jnp.sqrt(var + 1e-5)
    hn = hn * params["gamma"] + params["beta"]
    return hn @ params["w2"]


def reference_forward_bf16_matched(x_nchw, params):
    """Same math with operands rounded to bf16 exactly where the kernel does,
    so the kernel result can be checked to tight tolerance."""
    f32 = lambda a: a.astype(jnp.bfloat16).astype(jnp.float32)
    x = f32(x_nchw.reshape(x_nchw.shape[0], -1))
    h = x @ f32(params["w1"]) + params["b1"]
    h = jnp.maximum(h, 0.01 * h)
    mean = jnp.mean(h, axis=-1, keepdims=True)
    var = jnp.mean((h - mean) ** 2, axis=-1, keepdims=True)
    hn = (h - mean) * jax.lax.rsqrt(var + 1e-5)
    w2f = params["gamma"][:, None] * params["w2"]
    b2f = params["beta"] @ params["w2"]
    return f32(hn) @ f32(w2f) + b2f


if __name__ == "__main__":
    # Small shapes: x is (B, C, H, W) = (16, 4, 8, 8) -> in_channels = 4*8*8 = 256
    B, C, H, W = 16, 4, 8, 8
    in_channels = C * H * W          # 256
    inner_channels = 128
    emb_dim = 64

    key = jax.random.PRNGKey(0)
    kx, kp = jax.random.split(key)
    x = jax.random.normal(kx, (B, C, H, W), jnp.float32)
    params = init_params(kp, in_channels, inner_channels, emb_dim)

    # block_b=8 so the batch grid actually runs 2 pipelined steps at this small B.
    y = conv_decoder_forward(x, params, block_b=8)
    y = jax.block_until_ready(y)
    assert y.shape == (B, emb_dim)

    # Tight check against a bf16-rounded-operand reference (same math, f32 accumulation).
    y_tight = reference_forward_bf16_matched(x, params)
    assert jnp.allclose(y, y_tight, atol=2e-3, rtol=2e-3), "mismatch vs bf16-matched reference"

    # Loose check against the pure-f32 PyTorch-equivalent reference (bf16 storage error only).
    y_f32 = reference_forward(x, params)
    assert jnp.allclose(y, y_f32, atol=5e-2, rtol=5e-2), "mismatch vs f32 reference"

    print("KERNEL_OK")
</pallas_src>

<mosaic_0001>
module attributes {stable_mosaic.version = 11 : i64} {
  func.func @conv_decoder_kernel(%arg0: i32, %arg1: memref<8x256xbf16, #tpu.memory_space<vmem>>, %arg2: memref<256x128xbf16, #tpu.memory_space<vmem>>, %arg3: memref<1x128xf32, #tpu.memory_space<vmem>>, %arg4: memref<128x128xbf16, #tpu.memory_space<vmem>>, %arg5: memref<1x128xf32, #tpu.memory_space<vmem>>, %arg6: memref<8x128xf32, #tpu.memory_space<vmem>>) attributes {dimension_semantics = [#tpu.dimension_semantics<parallel>], iteration_bounds = array<i64: 2>, scalar_prefetch = 0 : i64, scratch_operands = 0 : i64, tpu.core_type = #tpu.core_type<tc>, window_params = [{transform_indices = @transform_0, window_bounds = array<i64: 8, 256>}, {pipeline_mode = #tpu.pipeline_mode<synchronous>, transform_indices = @transform_1, window_bounds = array<i64: 256, 128>}, {pipeline_mode = #tpu.pipeline_mode<synchronous>, transform_indices = @transform_2, window_bounds = array<i64: 1, 128>}, {pipeline_mode = #tpu.pipeline_mode<synchronous>, transform_indices = @transform_3, window_bounds = array<i64: 128, 128>}, {pipeline_mode = #tpu.pipeline_mode<synchronous>, transform_indices = @transform_4, window_bounds = array<i64: 1, 128>}, {transform_indices = @transform_5, window_bounds = array<i64: 8, 128>}]} {
    %c0 = arith.constant 0 : index
    %c0_0 = arith.constant 0 : index
    %0 = vector.load %arg1[%c0, %c0_0] : memref<8x256xbf16, #tpu.memory_space<vmem>>, vector<8x256xbf16>
    %c0_1 = arith.constant 0 : index
    %c0_2 = arith.constant 0 : index
    %1 = vector.load %arg2[%c0_1, %c0_2] : memref<256x128xbf16, #tpu.memory_space<vmem>>, vector<256x128xbf16>
    %cst = arith.constant dense<0.000000e+00> : vector<8x128xf32>
    %2 = tpu.matmul %0, %1, %cst {dimension_numbers = #tpu.dot_dimension_numbers<[1], [0], [0], [1], [0, 0, 1, 1], [], []>} : vector<8x256xbf16>, vector<256x128xbf16>, vector<8x128xf32> -> vector<8x128xf32>
    %c0_3 = arith.constant 0 : index
    %c0_4 = arith.constant 0 : index
    %3 = vector.load %arg3[%c0_3, %c0_4] : memref<1x128xf32, #tpu.memory_space<vmem>>, vector<1x128xf32>
    %4 = vector.broadcast %3 : vector<1x128xf32> to vector<8x128xf32>
    %5 = arith.addf %2, %4 : vector<8x128xf32>
    %cst_5 = arith.constant 0.00999999977 : f32
    %6 = vector.broadcast %cst_5 : f32 to vector<8x128xf32>
    %7 = arith.mulf %6, %5 : vector<8x128xf32>
    %8 = arith.maximumf %5, %7 : vector<8x128xf32>
    %cst_6 = arith.constant dense<0.000000e+00> : vector<8xf32>
    %9 = vector.multi_reduction <add>, %8, %cst_6 [1] : vector<8x128xf32> to vector<8xf32>
    %10 = vector.shape_cast %9 : vector<8xf32> to vector<8x1xf32>
    %cst_7 = arith.constant 1.280000e+02 : f32
    %11 = vector.broadcast %cst_7 : f32 to vector<8x1xf32>
    %12 = arith.divf %10, %11 : vector<8x1xf32>
    %13 = vector.broadcast %12 : vector<8x1xf32> to vector<8x128xf32>
    %14 = arith.subf %8, %13 : vector<8x128xf32>
    %15 = arith.mulf %14, %14 : vector<8x128xf32>
    %cst_8 = arith.constant dense<0.000000e+00> : vector<8xf32>
    %16 = vector.multi_reduction <add>, %15, %cst_8 [1] : vector<8x128xf32> to vector<8xf32>
    %17 = vector.shape_cast %16 : vector<8xf32> to vector<8x1xf32>
    %cst_9 = arith.constant 1.280000e+02 : f32
    %18 = vector.broadcast %cst_9 : f32 to vector<8x1xf32>
    %19 = arith.divf %17, %18 : vector<8x1xf32>
    %cst_10 = arith.constant 9.99999974E-6 : f32
    %20 = vector.broadcast %cst_10 : f32 to vector<8x1xf32>
    %21 = arith.addf %19, %20 : vector<8x1xf32>
    %22 = math.rsqrt %21 : vector<8x1xf32>
    %23 = vector.broadcast %22 : vector<8x1xf32> to vector<8x128xf32>
    %24 = arith.mulf %14, %23 : vector<8x128xf32>
    %25 = arith.truncf %24 : vector<8x128xf32> to vector<8x128xbf16>
    %c0_11 = arith.constant 0 : index
    %c0_12 = arith.constant 0 : index
    %26 = vector.load %arg4[%c0_11, %c0_12] : memref<128x128xbf16, #tpu.memory_space<vmem>>, vector<128x128xbf16>
    %cst_13 = arith.constant dense<0.000000e+00> : vector<8x128xf32>
    %27 = tpu.matmul %25, %26, %cst_13 {dimension_numbers = #tpu.dot_dimension_numbers<[1], [0], [0], [1], [0, 0, 1, 1], [], []>} : vector<8x128xbf16>, vector<128x128xbf16>, vector<8x128xf32> -> vector<8x128xf32>
    %c0_14 = arith.constant 0 : index
    %c0_15 = arith.constant 0 : index
    %28 = vector.load %arg5[%c0_14, %c0_15] : memref<1x128xf32, #tpu.memory_space<vmem>>, vector<1x128xf32>
    %29 = vector.broadcast %28 : vector<1x128xf32> to vector<8x128xf32>
    %30 = arith.addf %27, %29 : vector<8x128xf32>
    %c0_16 = arith.constant 0 : index
    %c0_17 = arith.constant 0 : index
    %31 = vector.load %arg6[%c0_16, %c0_17] : memref<8x128xf32, #tpu.memory_space<vmem>>, vector<8x128xf32>
    tpu.vector_store %arg6[%c0_16, %c0_17], %30 {strides = array<i32>} : memref<8x128xf32, #tpu.memory_space<vmem>>, vector<8x128xf32>,
    return
  }
  func.func @transform_0(%arg0: i32) -> (i32, i32) {
    %c0_i32 = arith.constant 0 : i32
    %c0_i32_0 = arith.constant 0 : i32
    return %arg0, %c0_i32 : i32, i32
  }
  func.func @transform_1(%arg0: i32) -> (i32, i32) {
    %c0_i32 = arith.constant 0 : i32
    %c0_i32_0 = arith.constant 0 : i32
    %c0_i32_1 = arith.constant 0 : i32
    return %c0_i32, %c0_i32_0 : i32, i32
  }
  func.func @transform_2(%arg0: i32) -> (i32, i32) {
    %c0_i32 = arith.constant 0 : i32
    %c0_i32_0 = arith.constant 0 : i32
    %c0_i32_1 = arith.constant 0 : i32
    return %c0_i32, %c0_i32_0 : i32, i32
  }
  func.func @transform_3(%arg0: i32) -> (i32, i32) {
    %c0_i32 = arith.constant 0 : i32
    %c0_i32_0 = arith.constant 0 : i32
    %c0_i32_1 = arith.constant 0 : i32
    return %c0_i32, %c0_i32_0 : i32, i32
  }
  func.func @transform_4(%arg0: i32) -> (i32, i32) {
    %c0_i32 = arith.constant 0 : i32
    %c0_i32_0 = arith.constant 0 : i32
    %c0_i32_1 = arith.constant 0 : i32
    return %c0_i32, %c0_i32_0 : i32, i32
  }
  func.func @transform_5(%arg0: i32) -> (i32, i32) {
    %c0_i32 = arith.constant 0 : i32
    %c0_i32_0 = arith.constant 0 : i32
    return %arg0, %c0_i32 : i32, i32
  }
}

</mosaic_0001>

<llo_original>
// kernel: tpu_custom_call.1
$region0: #{tpu_custom_call.1}
  #allocation0 [shape = 'u32[]', space=smem, size = 0x4, offset = 0x4, fixed_abs, tag = 'smem constant byte address 0x4 - core index']
  #allocation1 [shape = 'u32[72,128]{1,0:T(1,128)}', space=vmem, size = 0x9000, scoped, tag = 'internal scratch']
  %s0 = inlined_call_operand.hbm [shape: bf16[16,256], index: 0, kind: input, shape index: {}]
  %s1 = inlined_call_operand.hbm [shape: bf16[256,128], index: 1, kind: input, shape index: {}]
  %s2 = inlined_call_operand.vmem [shape: f32[1,128], index: 2, kind: input, shape index: {}]
  %s3 = inlined_call_operand.hbm [shape: bf16[128,128], index: 3, kind: input, shape index: {}]
  %s4 = inlined_call_operand.vmem [shape: f32[1,128], index: 4, kind: input, shape index: {}]
  %s5 = inlined_call_operand.hbm [shape: f32[16,128], index: 5, kind: output, shape index: {}]
  %s6 = sld [smem:[#allocation0]]
  $region65: #{tpu_custom_call.1} parent=0
    _
  %s8 = ssub.s32 1, %s6
  %s9 = scalar_select 0, %s8, %s6
  $region1: #{tpu_custom_call.1} parent=0
    #allocation2 [shape = 'u8[8192]{0}', space=vmem, size = 0x2000, scoped, tag = 'input window, operand 0']
    #allocation3 [shape = 's32[2]{0}', space=sflag, size = 0x8, scoped, tag = 'scoped memory for tpu_custom_call.1']
    #allocation4 [shape = 's32[2]{0}', space=sflag, size = 0x8, scoped, tag = 'scoped memory for tpu_custom_call.1']
    #allocation5 [shape = 'u8[65536]{0}', space=vmem, size = 0x10000, scoped, tag = 'input window, operand 1, single buffered']
    #allocation6 [shape = 's32[1]{0}', space=sflag, size = 0x4, scoped, tag = 'scoped memory for tpu_custom_call.1']
    #allocation7 [shape = 'u8[32768]{0}', space=vmem, size = 0x8000, scoped, tag = 'input window, operand 3, single buffered']
    #allocation8 [shape = 'u8[8192]{0}', space=vmem, size = 0x2000, scoped, tag = 'output window, operand 0']
    %10 = vsyncpa [#allocation3], 0
    %s11 = scalar_lea.sflag [#allocation3], 1
    %12 = vsyncpa %s11, 0
    %13 = vsyncpa [#allocation6], 0
    %14 = vsyncpa [#allocation4], 0
    %s15 = scalar_lea.sflag [#allocation4], 1
    %16 = vsyncpa %s15, 0
    loop: start=0, step=1, limit=4
    $region2: #{tpu_custom_call.1} parent=1 // loop_pre_header
      _
    $region3: #{tpu_custom_call.1} parent=1 // loop_header
      %s18 = sphi 0, %s22
      %p19 = scmp.ge.s32.totalorder %s18, 4
      %s28 = sphi 0, %s30
      %s31 = sphi 0, %s28
      %s32 = sphi 0, %s31
      %s48 = sphi 0, %s32
      %s52 = sphi 0, %s52
      %s54 = sphi 0, %s52
      %s55 = sphi 0, %s54
      %s69 = sphi 0, %s55
      %s73 = sphi 0, %s73
      %s75 = sphi 0, %s73
      %s76 = sphi 0, %s75
      %s90 = sphi 0, %s76
      %s94 = sphi 0, %s94
      %s96 = sphi 0, %s94
      %s97 = sphi 0, %s96
      %s111 = sphi 0, %s97
      %s115 = sphi 0, %s115
      %s117 = sphi 0, %s115
      %s118 = sphi 0, %s117
      %s132 = sphi 0, %s118
      %s138 = sphi 0, %s140
      %s141 = sphi 0, %s138
      %s142 = sphi 0, %s141
      %s158 = sphi 0, %s142
    $region4: #{tpu_custom_call.1} parent=1 // loop_header_branch
      %21 = sbr.rel (%p19) target = $region8
    $region5: #{tpu_custom_call.1} parent=1 // loop_body
      %s23 = ssub.s32 %s18, 1
      %s24 = ssub.s32 %s18, 2
      %s25 = sadd.s32 %s18, 1
      %s26 = ssub.s32 %s18, %s25
      %p27 = scmp.eq.s32.totalorder %s26, 0
      %s29 = sadd.s32 %s28, 1
      %s30 = scalar_select %p27, %s28, %s29
      %p33 = pneg %p27
      %p34 = scmp.eq.s32.totalorder %s18, 1
      %p35 = por %p33, %p34
      %p36 = scmp.ne.s32.totalorder %s28, %s31
      %p37 = scmp.eq.s32.totalorder %s18, 0
      %p38 = por %p36, %p37
      %p39 = scmp.ne.s32.totalorder %s28, %s31
      %p40 = scmp.eq.s32.totalorder %s23, 1
      %p41 = por %p39, %p40
      %p42 = scmp.ne.s32.totalorder %s31, %s32
      %p43 = scmp.eq.s32.totalorder %s23, 0
      %p44 = por %p42, %p43
      %p45 = scmp.ne.s32.totalorder %s31, %s32
      %p46 = scmp.eq.s32.totalorder %s24, 1
      %p47 = por %p45, %p46
      %p49 = scmp.ne.s32.totalorder %s32, %s48
      %p50 = scmp.eq.s32.totalorder %s24, 0
      %p51 = por %p49, %p50
      %s53 = sadd.s32 %s52, 1
      %p56 = scmp.eq.s32.totalorder %s18, 1
      %p57 = scmp.ne.s32.totalorder %s52, %s54
      %p58 = scmp.eq.s32.totalorder %s18, 0
      %p59 = por %p57, %p58
      %p60 = scmp.ne.s32.totalorder %s52, %s54
      %p61 = scmp.eq.s32.totalorder %s23, 1
      %p62 = por %p60, %p61
      %p63 = scmp.ne.s32.totalorder %s54, %s55
      %p64 = scmp.eq.s32.totalorder %s23, 0
      %p65 = por %p63, %p64
      %p66 = scmp.ne.s32.totalorder %s54, %s55
      %p67 = scmp.eq.s32.totalorder %s24, 1
      %p68 = por %p66, %p67
      %p70 = scmp.ne.s32.totalorder %s55, %s69
      %p71 = scmp.eq.s32.totalorder %s24, 0
      %p72 = por %p70, %p71
      %s74 = sadd.s32 %s73, 1
      %p77 = scmp.eq.s32.totalorder %s18, 1
      %p78 = scmp.ne.s32.totalorder %s73, %s75
      %p79 = scmp.eq.s32.totalorder %s18, 0
      %p80 = por %p78, %p79
      %p81 = scmp.ne.s32.totalorder %s73, %s75
      %p82 = scmp.eq.s32.totalorder %s23, 1
      %p83 = por %p81, %p82
      %p84 = scmp.ne.s32.totalorder %s75, %s76
      %p85 = scmp.eq.s32.totalorder %s23, 0
      %p86 = por %p84, %p85
      %p87 = scmp.ne.s32.totalorder %s75, %s76
      %p88 = scmp.eq.s32.totalorder %s24, 1
      %p89 = por %p87, %p88
      %p91 = scmp.ne.s32.totalorder %s76, %s90
      %p92 = scmp.eq.s32.totalorder %s24, 0
      %p93 = por %p91, %p92
      %s95 = sadd.s32 %s94, 1
      %p98 = scmp.eq.s32.totalorder %s18, 1
      %p99 = scmp.ne.s32.totalorder %s94, %s96
      %p100 = scmp.eq.s32.totalorder %s18, 0
      %p101 = por %p99, %p100
      %p102 = scmp.ne.s32.totalorder %s94, %s96
      %p103 = scmp.eq.s32.totalorder %s23, 1
      %p104 = por %p102, %p103
      %p105 = scmp.ne.s32.totalorder %s96, %s97
      %p106 = scmp.eq.s32.totalorder %s23, 0
      %p107 = por %p105, %p106
      %p108 = scmp.ne.s32.totalorder %s96, %s97
      %p109 = scmp.eq.s32.totalorder %s24, 1
      %p110 = por %p108, %p109
      %p112 = scmp.ne.s32.totalorder %s97, %s111
      %p113 = scmp.eq.s32.totalorder %s24, 0
      %p114 = por %p112, %p113
      %s116 = sadd.s32 %s115, 1
      %p119 = scmp.eq.s32.totalorder %s18, 1
      %p120 = scmp.ne.s32.totalorder %s115, %s117
      %p121 = scmp.eq.s32.totalorder %s18, 0
      %p122 = por %p120, %p121
      %p123 = scmp.ne.s32.totalorder %s115, %s117
      %p124 = scmp.eq.s32.totalorder %s23, 1
      %p125 = por %p123, %p124
      %p126 = scmp.ne.s32.totalorder %s117, %s118
      %p127 = scmp.eq.s32.totalorder %s23, 0
      %p128 = por %p126, %p127
      %p129 = scmp.ne.s32.totalorder %s117, %s118
      %p130 = scmp.eq.s32.totalorder %s24, 1
      %p131 = por %p129, %p130
      %p133 = scmp.ne.s32.totalorder %s118, %s132
      %p134 = scmp.eq.s32.totalorder %s24, 0
      %p135 = por %p133, %p134
      %s136 = ssub.s32 %s18, %s25
      %p137 = scmp.eq.s32.totalorder %s136, 0
      %s139 = sadd.s32 %s138, 1
      %s140 = scalar_select %p137, %s138, %s139
      %p143 = pneg %p137
      %p144 = scmp.eq.s32.totalorder %s18, 1
      %p145 = por %p143, %p144
      %p146 = scmp.ne.s32.totalorder %s138, %s141
      %p147 = scmp.eq.s32.totalorder %s18, 0
      %p148 = por %p146, %p147
      %p149 = scmp.ne.s32.totalorder %s138, %s141
      %p150 = scmp.eq.s32.totalorder %s23, 1
      %p151 = por %p149, %p150
      %p152 = scmp.ne.s32.totalorder %s141, %s142
      %p153 = scmp.eq.s32.totalorder %s23, 0
      %p154 = por %p152, %p153
      %p155 = scmp.ne.s32.totalorder %s141, %s142
      %p156 = scmp.eq.s32.totalorder %s24, 1
      %p157 = por %p155, %p156
      %p159 = scmp.ne.s32.totalorder %s142, %s158
      %p160 = scmp.eq.s32.totalorder %s24, 0
      %p161 = por %p159, %p160
      %p162 = scmp.le.s32.totalorder 1, %s18
      %p163 = scmp.lt.s32.totalorder %s18, 3
      %p164 = pnand %p162, %p163
      %p165 = pneg %p164
      // Predicated region
      $region9: #{tpu_custom_call.1} parent=5 // pred_check
        _
      $region10: #{tpu_custom_call.1} parent=5 // pred_check_branch
        %167 = sbr.rel (%p164) target = $region12
      $region11: #{tpu_custom_call.1} parent=5 // pred_region
        %s168 = ssub.s32 %s18, 1
        // Predicated region
        $region13: #{tpu_custom_call.1} parent=11 // pred_check
          %p169 = pneg %p65
        $region14: #{tpu_custom_call.1} parent=11 // pred_check_branch
          %171 = sbr.rel (%p169) target = $region16
        $region15: #{tpu_custom_call.1} parent=11 // pred_region
          %173 = vsyncadd [#allocation6], 0
          %s174 = sshll.u32 %s1, 4
          %s175 = int_to_ptr.hbm [resolvable:$true] %s174
          %s176 = sshll.u32 [#allocation5], 4
          %s177 = int_to_ptr.vmem [resolvable:$true] %s176
          %182 = dma.hbm_to_vmem [thread:$0]  %s175, 2048, %s177, [#allocation6], 64, 64, 4
        $region16: #{tpu_custom_call.1} parent=11 // pred_fallthru
          _
        // Predicated region
        $region17: #{tpu_custom_call.1} parent=11 // pred_check
          %p183 = pneg %p86
        $region18: #{tpu_custom_call.1} parent=11 // pred_check_branch
          %185 = sbr.rel (%p183) target = $region20
        $region19: #{tpu_custom_call.1} parent=11 // pred_region
          _
        $region20: #{tpu_custom_call.1} parent=11 // pred_fallthru
          _
        // Predicated region
        $region21: #{tpu_custom_call.1} parent=11 // pred_check
          %p186 = pneg %p107
        $region22: #{tpu_custom_call.1} parent=11 // pred_check_branch
          %188 = sbr.rel (%p186) target = $region24
        $region23: #{tpu_custom_call.1} parent=11 // pred_region
          %190 = vsyncadd [#allocation6], 0
          %s191 = sshll.u32 %s3, 4
          %s192 = int_to_ptr.hbm [resolvable:$true] %s191
          %s193 = sshll.u32 [#allocation7], 4
          %s194 = int_to_ptr.vmem [resolvable:$true] %s193
          %199 = dma.hbm_to_vmem [thread:$0]  %s192, 1024, %s194, [#allocation6], 64, 64, 4
        $region24: #{tpu_custom_call.1} parent=11 // pred_fallthru
          _
        // Predicated region
        $region25: #{tpu_custom_call.1} parent=11 // pred_check
          %p200 = pneg %p128
        $region26: #{tpu_custom_call.1} parent=11 // pred_check_branch
          %202 = sbr.rel (%p200) target = $region28
        $region27: #{tpu_custom_call.1} parent=11 // pred_region
          _
        $region28: #{tpu_custom_call.1} parent=11 // pred_fallthru
          _
      $region12: #{tpu_custom_call.1} parent=5 // pred_fallthru
        _
      %p203 = scmp.lt.s32.totalorder %s18, 2
      // Predicated region
      $region29: #{tpu_custom_call.1} parent=5 // pred_check
        %p204 = pneg %p203
      $region30: #{tpu_custom_call.1} parent=5 // pred_check_branch
        %206 = sbr.rel (%p204) target = $region32
      $region31: #{tpu_custom_call.1} parent=5 // pred_region
        // Predicated region
        $region33: #{tpu_custom_call.1} parent=31 // pred_check
          %p207 = pneg %p38
        $region34: #{tpu_custom_call.1} parent=31 // pred_check_branch
          %209 = sbr.rel (%p207) target = $region36
        $region35: #{tpu_custom_call.1} parent=31 // pred_region
          %s210 = sand.u32 %s28, 1
          %s211 = scalar_lea.sflag [#allocation3], %s210
          %s212 = sand.u32 %s28, 1
          %s213 = smul.addr %s212, 8
          %s214 = scalar_lea.vmem [#allocation2], %s213
          %216 = vsyncadd %s211, 0
          %s217 = smul.addr %s18, 2
          %s218 = smul.addr %s217, 4
          %s219 = scalar_lea.hbm %s0, %s218
          %s221 = sshll.u32 %s219, 4
          %s222 = int_to_ptr.hbm [resolvable:$true] %s221
          %s223 = sshll.u32 %s214, 4
          %s224 = int_to_ptr.vmem [resolvable:$true] %s223
          %226 = dma.hbm_to_vmem [thread:$0]  %s222, 128, %s224, %s211
        $region36: #{tpu_custom_call.1} parent=31 // pred_fallthru
          _
      $region32: #{tpu_custom_call.1} parent=5 // pred_fallthru
        _
      %p227 = scmp.le.s32.totalorder 1, %s18
      %p228 = scmp.lt.s32.totalorder %s18, 3
      %p229 = pnand %p227, %p228
      %p230 = pneg %p229
      // Predicated region
      $region37: #{tpu_custom_call.1} parent=5 // pred_check
        _
      $region38: #{tpu_custom_call.1} parent=5 // pred_check_branch
        %232 = sbr.rel (%p229) target = $region40
      $region39: #{tpu_custom_call.1} parent=5 // pred_region
        %s233 = ssub.s32 %s18, 1
        %s234 = sand.u32 %s31, 1
        %s235 = scalar_lea.sflag [#allocation3], %s234
        %s236 = sand.u32 %s31, 1
        %s237 = smul.addr %s236, 8
        %s238 = scalar_lea.vmem [#allocation2], %s237
        // Predicated region
        $region41: #{tpu_custom_call.1} parent=39 // pred_check
          %p239 = pneg %p44
        $region42: #{tpu_custom_call.1} parent=39 // pred_check_branch
          %241 = sbr.rel (%p239) target = $region44
        $region43: #{tpu_custom_call.1} parent=39 // pred_region
          %243 = dma.done %s235, 128
        $region44: #{tpu_custom_call.1} parent=39 // pred_fallthru
          _
        // Predicated region
        $region45: #{tpu_custom_call.1} parent=39 // pred_check
          %p244 = pneg %p65
        $region46: #{tpu_custom_call.1} parent=39 // pred_check_branch
          %246 = sbr.rel (%p244) target = $region48
        $region47: #{tpu_custom_call.1} parent=39 // pred_region
          %248 = dma.done [#allocation6], 2048
        $region48: #{tpu_custom_call.1} parent=39 // pred_fallthru
          _
        // Predicated region
        $region49: #{tpu_custom_call.1} parent=39 // pred_check
          %p249 = pneg %p107
        $region50: #{tpu_custom_call.1} parent=39 // pred_check_branch
          %251 = sbr.rel (%p249) target = $region52
        $region51: #{tpu_custom_call.1} parent=39 // pred_region
          %253 = dma.done [#allocation6], 1024
        $region52: #{tpu_custom_call.1} parent=39 // pred_fallthru
          _
        %s254 = sand.u32 %s31, 1
        %s255 = scalar_lea.sflag [#allocation3], %s254
        %s256 = sand.u32 %s31, 1
        %s257 = smul.addr %s256, 8
        %s258 = scalar_lea.vmem [#allocation2], %s257
        %p259 = pneg %p44
        %p260 = pneg %p41
        %p261 = pneg %p65
        %p262 = pneg %p62
        %p263 = pneg %p86
        %p264 = pneg %p83
        %p265 = pneg %p107
        %p266 = pneg %p104
        %p267 = pneg %p128
        %p268 = pneg %p125
        %p269 = pneg %p154
        %p270 = pneg %p151
        %s271 = sand.u32 %s141, 1
        %s272 = scalar_lea.sflag [#allocation4], %s271
        %s273 = sand.u32 %s141, 1
        %s274 = smul.addr %s273, 8
        %s275 = scalar_lea.vmem [#allocation8], %s274
        %v276 = vld [vmem:[%s238] sm:$0xff]
        %v277 = vld [vmem:[#allocation5] sm:$0xf]
        %v278 = vld [vmem:[#allocation5 + $0x4] sm:$0xf]
        %v279 = vld [vmem:[#allocation5 + $0x8] sm:$0xf]
        %v280 = vld [vmem:[#allocation5 + $0xc] sm:$0xf]
        %v281 = vld [vmem:[#allocation5 + $0x10] sm:$0xf]
        %v282 = vld [vmem:[#allocation5 + $0x14] sm:$0xf]
        %v283 = vld [vmem:[#allocation5 + $0x18] sm:$0xf]
        %v284 = vld [vmem:[#allocation5 + $0x1c] sm:$0xf]
        %v285 = vld [vmem:[#allocation5 + $0x20] sm:$0xf]
        %v286 = vld [vmem:[#allocation5 + $0x24] sm:$0xf]
        %v287 = vld [vmem:[#allocation5 + $0x28] sm:$0xf]
        %v288 = vld [vmem:[#allocation5 + $0x2c] sm:$0xf]
        %v289 = vld [vmem:[#allocation5 + $0x30] sm:$0xf]
        %v290 = vld [vmem:[#allocation5 + $0x34] sm:$0xf]
        %v291 = vld [vmem:[#allocation5 + $0x38] sm:$0xf]
        %v292 = vld [vmem:[#allocation5 + $0x3c] sm:$0xf]
        %v293 = vld [vmem:[#allocation5 + $0x40] sm:$0xf]
        %v294 = vld [vmem:[#allocation5 + $0x44] sm:$0xf]
        %v295 = vld [vmem:[#allocation5 + $0x48] sm:$0xf]
        %v296 = vld [vmem:[#allocation5 + $0x4c] sm:$0xf]
        %v297 = vld [vmem:[#allocation5 + $0x50] sm:$0xf]
        %v298 = vld [vmem:[#allocation5 + $0x54] sm:$0xf]
        %v299 = vld [vmem:[#allocation5 + $0x58] sm:$0xf]
        %v300 = vld [vmem:[#allocation5 + $0x5c] sm:$0xf]
        %v301 = vld [vmem:[#allocation5 + $0x60] sm:$0xf]
        %v302 = vld [vmem:[#allocation5 + $0x64] sm:$0xf]
        %v303 = vld [vmem:[#allocation5 + $0x68] sm:$0xf]
        %v304 = vld [vmem:[#allocation5 + $0x6c] sm:$0xf]
        %v305 = vld [vmem:[#allocation5 + $0x70] sm:$0xf]
        %v306 = vld [vmem:[#allocation5 + $0x74] sm:$0xf]
        %v307 = vld [vmem:[#allocation5 + $0x78] sm:$0xf]
        %v308 = vld [vmem:[#allocation5 + $0x7c] sm:$0xf]
        %v309 = vld [vmem:[%s2] sm:$0x1]
        %v311 = vperm.slane %v309, 0
        %v314 = vunpack.c.l.b16 %v276
        %v315 = vunpack.c.h.b16 %v276
        %v316 = vpack.c.b16 %v314, %v314
        %v317 = vpack.c.b16 %v315, %v315
        %v352 = vunpack.c.l.b16 %v277
        %v353 = vunpack.c.l.b16 %v278
        %v354 = vunpack.c.l.b16 %v279
        %v355 = vunpack.c.l.b16 %v280
        %v356 = vunpack.c.l.b16 %v281
        %v357 = vunpack.c.l.b16 %v282
        %v358 = vunpack.c.l.b16 %v283
        %v359 = vunpack.c.l.b16 %v284
        %v360 = vunpack.c.l.b16 %v285
        %v361 = vunpack.c.l.b16 %v286
        %v362 = vunpack.c.l.b16 %v287
        %v363 = vunpack.c.l.b16 %v288
        %v364 = vunpack.c.l.b16 %v289
        %v365 = vunpack.c.l.b16 %v290
        %v366 = vunpack.c.l.b16 %v291
        %v367 = vunpack.c.l.b16 %v292
        %v368 = vunpack.c.l.b16 %v293
        %v369 = vunpack.c.l.b16 %v294
        %v370 = vunpack.c.l.b16 %v295
        %v371 = vunpack.c.l.b16 %v296
        %v372 = vunpack.c.l.b16 %v297
        %v373 = vunpack.c.l.b16 %v298
        %v374 = vunpack.c.l.b16 %v299
        %v375 = vunpack.c.l.b16 %v300
        %v376 = vunpack.c.l.b16 %v301
        %v377 = vunpack.c.l.b16 %v302
        %v378 = vunpack.c.l.b16 %v303
        %v379 = vunpack.c.l.b16 %v304
        %v380 = vunpack.c.l.b16 %v305
        %v381 = vunpack.c.l.b16 %v306
        %v382 = vunpack.c.l.b16 %v307
        %v383 = vunpack.c.l.b16 %v308
        %v384 = vpack.c.b16 %v353, %v352
        %v385 = vpack.c.b16 %v355, %v354
        %v386 = vpack.c.b16 %v357, %v356
        %v387 = vpack.c.b16 %v359, %v358
        %v388 = vpack.c.b16 %v361, %v360
        %v389 = vpack.c.b16 %v363, %v362
        %v390 = vpack.c.b16 %v365, %v364
        %v391 = vpack.c.b16 %v367, %v366
        %v392 = vpack.c.b16 %v369, %v368
        %v393 = vpack.c.b16 %v371, %v370
        %v394 = vpack.c.b16 %v373, %v372
        %v395 = vpack.c.b16 %v375, %v374
        %v396 = vpack.c.b16 %v377, %v376
        %v397 = vpack.c.b16 %v379, %v378
        %v398 = vpack.c.b16 %v381, %v380
        %v399 = vpack.c.b16 %v383, %v382
        %416 = vmatpush.bf16.msra.mxu0 %v391
        %417 = vmatpush.bf16.msra.mxu0 %v390
        %418 = vmatpush.bf16.msra.mxu0 %v389
        %419 = vmatpush.bf16.msra.mxu0 %v388
        %420 = vmatpush.bf16.msra.mxu0 %v387
        %421 = vmatpush.bf16.msra.mxu0 %v386
        %422 = vmatpush.bf16.msra.mxu0 %v385
        %423 = vmatpush.bf16.msra.mxu0 %v384
        %424 = vmatmul.bf16.gmra.mxu0 %v316
        %v425 = vpop.f32.mrf.mxu0
        %v426 = vadd.f32 %v311, %v425
        %v427 = vpop.f32.mrf.mxu0
        %428 = vdwg.mxu0
        %429 = vmatpush.bf16.msra.mxu0 %v399
        %430 = vmatpush.bf16.msra.mxu0 %v398
        %431 = vmatpush.bf16.msra.mxu0 %v397
        %432 = vmatpush.bf16.msra.mxu0 %v396
        %433 = vmatpush.bf16.msra.mxu0 %v395
        %434 = vmatpush.bf16.msra.mxu0 %v394
        %435 = vmatpush.bf16.msra.mxu0 %v393
        %436 = vmatpush.bf16.msra.mxu0 %v392
        %437 = vmatmul.bf16.gmra.mxu0 %v317
        %v438 = vpop.f32.mrf.mxu0
        %v439 = vadd.f32 %v426, %v438
        %v440 = vpop.f32.mrf.mxu0
        %441 = vdwg.mxu0
        %v442 = vmul.f32 %v439, 0.01
        %v443 = vmax.f32 %v439, %v442
        %444 = vadd.xlane.f32.xlu0 %v443
        %v445 = vpop.xlane.xlu0 %444
        %v446 = vrcp.pop 128.0
        %v447 = vmul.f32 128.0, %v446
        %v448 = vsub.f32 1.0, %v447
        %v449 = vmul.f32 %v446, %v448
        %v450 = vadd.f32 %v446, %v449
        %vm451 = vweird.f32 %v446
        %v452 = vsel %vm451, %v446, %v450
        %v453 = vmul.f32 %v445, %v452
        %v454 = vsub.f32 %v443, %v453
        %v455 = vmul.f32 %v454, %v454
        %456 = vadd.xlane.f32.xlu0 %v455
        %v457 = vpop.xlane.xlu0 %456
        %v458 = vmul.f32 %v457, %v452
        %v459 = vadd.f32 %v458, 1e-05
        %v460 = vrsqrt.pop %v459
        %v461 = vmul.f32 %v460, %v459
        %v462 = vmul.f32 %v461, %v460
        %v463 = vmul.f32 0.5, %v462
        %v464 = vsub.f32 1.5, %v463
        %v465 = vmul.f32 %v460, %v464
        %vm466 = vweird.f32 %v459
        %vm467 = vweird.f32 %v460
        %vm468 = vmor %vm466, %vm467
        %v469 = vsel %vm468, %v460, %v465
        %v470 = vmul.f32 %v454, %v469
        %v471 = vpack.c.bf16 %v470, %v470
        %v472 = vld [vmem:[#allocation7] sm:$0xf]
        %v473 = vld [vmem:[#allocation7 + $0x4] sm:$0xf]
        %v474 = vld [vmem:[#allocation7 + $0x8] sm:$0xf]
        %v475 = vld [vmem:[#allocation7 + $0xc] sm:$0xf]
        %v476 = vld [vmem:[#allocation7 + $0x10] sm:$0xf]
        %v477 = vld [vmem:[#allocation7 + $0x14] sm:$0xf]
        %v478 = vld [vmem:[#allocation7 + $0x18] sm:$0xf]
        %v479 = vld [vmem:[#allocation7 + $0x1c] sm:$0xf]
        %v480 = vld [vmem:[#allocation7 + $0x20] sm:$0xf]
        %v481 = vld [vmem:[#allocation7 + $0x24] sm:$0xf]
        %v482 = vld [vmem:[#allocation7 + $0x28] sm:$0xf]
        %v483 = vld [vmem:[#allocation7 + $0x2c] sm:$0xf]
        %v484 = vld [vmem:[#allocation7 + $0x30] sm:$0xf]
        %v485 = vld [vmem:[#allocation7 + $0x34] sm:$0xf]
        %v486 = vld [vmem:[#allocation7 + $0x38] sm:$0xf]
        %v487 = vld [vmem:[#allocation7 + $0x3c] sm:$0xf]
        %v488 = vld [vmem:[%s4] sm:$0x1]
        %v490 = vperm.slane %v488, 0
        %v508 = vunpack.c.l.b16 %v472
        %v509 = vunpack.c.l.b16 %v473
        %v510 = vunpack.c.l.b16 %v474
        %v511 = vunpack.c.l.b16 %v475
        %v512 = vunpack.c.l.b16 %v476
        %v513 = vunpack.c.l.b16 %v477
        %v514 = vunpack.c.l.b16 %v478
        %v515 = vunpack.c.l.b16 %v479
        %v516 = vunpack.c.l.b16 %v480
        %v517 = vunpack.c.l.b16 %v481
        %v518 = vunpack.c.l.b16 %v482
        %v519 = vunpack.c.l.b16 %v483
        %v520 = vunpack.c.l.b16 %v484
        %v521 = vunpack.c.l.b16 %v485
        %v522 = vunpack.c.l.b16 %v486
        %v523 = vunpack.c.l.b16 %v487
        %v524 = vpack.c.b16 %v509, %v508
        %v525 = vpack.c.b16 %v511, %v510
        %v526 = vpack.c.b16 %v513, %v512
        %v527 = vpack.c.b16 %v515, %v514
        %v528 = vpack.c.b16 %v517, %v516
        %v529 = vpack.c.b16 %v519, %v518
        %v530 = vpack.c.b16 %v521, %v520
        %v531 = vpack.c.b16 %v523, %v522
        %540 = vmatpush.bf16.msra.mxu0 %v531
        %541 = vmatpush.bf16.msra.mxu0 %v530
        %542 = vmatpush.bf16.msra.mxu0 %v529
        %543 = vmatpush.bf16.msra.mxu0 %v528
        %544 = vmatpush.bf16.msra.mxu0 %v527
        %545 = vmatpush.bf16.msra.mxu0 %v526
        %546 = vmatpush.bf16.msra.mxu0 %v525
        %547 = vmatpush.bf16.msra.mxu0 %v524
        %548 = vmatmul.bf16.gmra.mxu0 %v471
        %v549 = vpop.f32.mrf.mxu0
        %v550 = vadd.f32 %v490, %v549
        %v551 = vpop.f32.mrf.mxu0
        %552 = vdwg.mxu0
        %553 = vst [vmem:[%s275] sm:$0xff] %v550
        %s554 = sand.u32 %s141, 1
        %s555 = scalar_lea.sflag [#allocation4], %s554
        %s556 = sand.u32 %s141, 1
        %s557 = smul.addr %s556, 8
        %s558 = scalar_lea.vmem [#allocation8], %s557
        // Predicated region
        $region53: #{tpu_custom_call.1} parent=39 // pred_check
          %p559 = pneg %p151
        $region54: #{tpu_custom_call.1} parent=39 // pred_check_branch
          %561 = sbr.rel (%p559) target = $region56
        $region55: #{tpu_custom_call.1} parent=39 // pred_region
          %563 = vsyncadd %s555, 0
          %s564 = smul.addr %s23, 8
          %s565 = scalar_lea.hbm %s5, %s564
          %s567 = sshll.u32 %s558, 4
          %s568 = int_to_ptr.vmem [resolvable:$true] %s567
          %s569 = sshll.u32 %s565, 4
          %s570 = int_to_ptr.hbm [resolvable:$true] %s569
          %572 = dma.vmem_to_hbm [thread:$0]  %s568, 128, %s570, %s555
        $region56: #{tpu_custom_call.1} parent=39 // pred_fallthru
          _
      $region40: #{tpu_custom_call.1} parent=5 // pred_fallthru
        _
      %p573 = scmp.le.s32.totalorder 2, %s18
      // Predicated region
      $region57: #{tpu_custom_call.1} parent=5 // pred_check
        %p574 = pneg %p573
      $region58: #{tpu_custom_call.1} parent=5 // pred_check_branch
        %576 = sbr.rel (%p574) target = $region60
      $region59: #{tpu_custom_call.1} parent=5 // pred_region
        %s577 = ssub.s32 %s18, 2
        // Predicated region
        $region61: #{tpu_custom_call.1} parent=59 // pred_check
          %p578 = pneg %p157
        $region62: #{tpu_custom_call.1} parent=59 // pred_check_branch
          %580 = sbr.rel (%p578) target = $region64
        $region63: #{tpu_custom_call.1} parent=59 // pred_region
          %s581 = sand.u32 %s142, 1
          %s582 = scalar_lea.sflag [#allocation4], %s581
          %s583 = sand.u32 %s142, 1
          %s584 = smul.addr %s583, 8
          %s585 = scalar_lea.vmem [#allocation8], %s584
          %587 = dma.done %s582, 128
        $region64: #{tpu_custom_call.1} parent=59 // pred_fallthru
          _
      $region60: #{tpu_custom_call.1} parent=5 // pred_fallthru
        _
    $region6: #{tpu_custom_call.1} parent=1 // loop_footer
      %s22 = sadd.s32 1, %s18
    $region7: #{tpu_custom_call.1} parent=1 // loop_footer_branch
      %17 = sbr.rel target = $region3
    $region8: #{tpu_custom_call.1} parent=1 // loop_exit
      _
    %588 = vsyncpa [#allocation3], 1
    %s589 = scalar_lea.sflag [#allocation3], 1
    %590 = vsyncpa %s589, 1
    %591 = vsyncpa [#allocation6], 1
    %592 = vsyncpa [#allocation4], 1
    %s593 = scalar_lea.sflag [#allocation4], 1
    %594 = vsyncpa %s593, 1

</llo_original>
